<compile_context>
chip_gen: v7x
topology: tpu7x:2x2x1
jax: 0.10.0
libtpu: 0.0.40
codegen_flags: <defaults>
</compile_context>

<pallas_src>
import math

import jax
import jax.numpy as jnp
from jax.experimental import pallas as pl
from jax.experimental.pallas import tpu as pltpu

# ---- model hyperparameters (small, consistent with the module) ----
EMBED = 32          # embedded_size
HEADS = 4
HEAD_DIM = EMBED // HEADS
FWD_EXP = 4         # forward_expansion -> hidden = 128
HIDDEN = FWD_EXP * EMBED
BATCH = 2
SEQ = 8
LN_EPS = 1e-5


def _layernorm(x, gamma, beta):
    mu = jnp.mean(x, axis=-1, keepdims=True)
    var = jnp.mean((x - mu) ** 2, axis=-1, keepdims=True)
    return (x - mu) * jax.lax.rsqrt(var + LN_EPS) * gamma + beta


def transformer_block_kernel(qf_ref, qhm_ref, kvt_ref, bias_ref,
                             wkv_ref, wo3_ref, w1_ref, w2_ref, vecs_ref,
                             out_ref):
    # qf_ref  : (T, E)    f32   flattened raw query (residual path)
    # qhm_ref : (H, T, D) bf16  head-major raw query
    # kvt_ref : (2, E, T) bf16  [key^T, value^T]
    # bias_ref: (T, T)    f32   additive mask over global tokens (0 / -1e20)
    # wkv_ref : (2, E, E) bf16  [wk, wv] in (out_features, in_features) orientation
    # wo3_ref : (H, D, E) bf16  wo^T split per head
    # w1_ref  : (E, HID)  bf16 ; w2_ref: (HID, E) bf16
    # vecs_ref: (7, HID)  f32   rows = [bo_eff, g1, be1, b1, b2, g2, be2]
    E = qf_ref.shape[1]
    H = wo3_ref.shape[0]
    D = wo3_ref.shape[1]
    T = qf_ref.shape[0]

    q_flat = qf_ref[...]                              # (T, E) f32
    vecs = vecs_ref[...]                              # (7, HID) f32
    bo_eff = vecs[0:1, :E]
    g1 = vecs[1:2, :E]
    be1 = vecs[2:3, :E]
    b1 = vecs[3:4, :]
    b2 = vecs[4:5, :E]
    g2 = vecs[5:6, :E]
    be2 = vecs[6:7, :E]

    # --- K / V projections, transposed: (E, T) = W(out,in) @ X^T  (bf16 in, f32 acc).
    # The key bias is omitted (cancelled by softmax); the value bias is folded into
    # bo_eff in the wrapper.
    keys_t = jnp.dot(wkv_ref[0], kvt_ref[0], preferred_element_type=jnp.float32)
    vals_t = jnp.dot(wkv_ref[1], kvt_ref[1], preferred_element_type=jnp.float32)

    # Free sublane-tile split (D == 8 == f32 sublane tile): heads land on the leading
    # batch axis, never on the lane axis.
    keys_hd = keys_t.reshape(H, D, T).astype(jnp.bfloat16)   # (H, D, T)
    vals_hd = vals_t.reshape(H, D, T).astype(jnp.bfloat16)   # (H, D, T)

    # --- attention: all heads in one batched matmul + a single softmax pass.
    energy = jnp.einsum('hqd,hdk->hqk', qhm_ref[...], keys_hd,
                        preferred_element_type=jnp.float32)          # (H, T, T) f32
    # mask-before-scale, exactly as in the reference module
    energy = (energy + bias_ref[...]) * jnp.float32(1.0 / math.sqrt(EMBED))

    m = jnp.max(energy, axis=-1, keepdims=True)
    p = jnp.exp(energy - m)
    denom = jnp.sum(p, axis=-1, keepdims=True)
    attn = p * pl.reciprocal(denom, approx=True)                     # EUP slot (free)

    head_out = jnp.einsum('hqk,hdk->hqd', attn.astype(jnp.bfloat16), vals_hd,
                          preferred_element_type=jnp.float32)        # (H, T, D) f32

    # --- output projection: one batched einsum against wo split per head, then a
    # leading-axis sum (no per-head serialized dots, no lane-axis concatenation).
    proj = jnp.einsum('hqd,hde->hqe', head_out.astype(jnp.bfloat16), wo3_ref[...],
                      preferred_element_type=jnp.float32)            # (H, T, E) f32
    attn_out = jnp.sum(proj, axis=0) + bo_eff                        # (T, E)

    # --- residual + norm1 (dropout = identity in eval mode)
    x = _layernorm(attn_out + q_flat, g1, be1)

    # --- feed-forward: Linear -> ReLU -> Linear (bf16 matmul inputs, f32 elsewhere)
    h1 = jnp.maximum(
        jnp.dot(x.astype(jnp.bfloat16), w1_ref[...],
                preferred_element_type=jnp.float32) + b1, 0.0)
    ff = jnp.dot(h1.astype(jnp.bfloat16), w2_ref[...],
                 preferred_element_type=jnp.float32) + b2

    # --- residual + norm2
    out_ref[...] = _layernorm(ff + x, g2, be2)


def transformer_block(value, key, query, mask, params):
    N, S, E = query.shape
    T = N * S
    H, D = HEADS, HEAD_DIM

    # ---- wrapper-side layout plumbing (no compute hoisting) ----
    q_flat = query.reshape(T, E)
    # raw query, head-major (H, T, D): the module overwrites the query projection
    # with the raw query reshape, so no q-projection is computed.
    q_hm = jnp.transpose(query.reshape(N, S, H, D), (2, 0, 1, 3)) \
              .reshape(H, T, D).astype(jnp.bfloat16)
    # key / value inputs transposed to (E, T) so the in-kernel projection
    # W(out,in) @ X^T yields a head-splittable (E, T) result directly.
    kvt = jnp.stack([key.reshape(T, E).T, value.reshape(T, E).T]).astype(jnp.bfloat16)

    # additive attention bias over global token indices (T, T):
    #   0 where same batch and mask != 0, else -1e20 (also masks cross-batch pairs).
    attn_bias = jnp.where(mask[:, 0] == 0, jnp.float32(-1e20), jnp.float32(0.0))
    same_batch = (jnp.arange(N)[:, None, None, None]
                  == jnp.arange(N)[None, None, :, None])              # (N,1,N,1)
    bias = jnp.where(same_batch, attn_bias[:, :, None, :],
                     jnp.float32(-1e20)).reshape(T, T)

    # packed bf16 weights (MXU inputs)
    w_kv = jnp.stack([params["wk"], params["wv"]]).astype(jnp.bfloat16)   # (2, E, E)
    wo3 = params["wo"].T.reshape(H, D, E).astype(jnp.bfloat16)            # (H, D, E)
    w1_t = params["w1"].T.astype(jnp.bfloat16)                            # (E, HID)
    w2_t = params["w2"].T.astype(jnp.bfloat16)                            # (HID, E)

    # packed f32 vectors: [bo_eff, g1, be1, b1, b2, g2, be2]; bo_eff folds the value
    # bias through the output projection (exact since softmax rows sum to 1).
    bo_eff = params["bv"] @ params["wo"].T + params["bo"]                 # (1, E)
    pad = lambda v: jnp.pad(v, ((0, 0), (0, HIDDEN - v.shape[1])))
    vecs = jnp.concatenate(
        [pad(bo_eff), pad(params["g1"]), pad(params["be1"]), params["b1"],
         pad(params["b2"]), pad(params["g2"]), pad(params["be2"])], axis=0)  # (7, HID)

    vspec = pl.BlockSpec(memory_space=pltpu.MemorySpace.VMEM)
    out_flat = pl.pallas_call(
        transformer_block_kernel,
        out_shape=jax.ShapeDtypeStruct((T, E), jnp.float32),
        in_specs=[vspec] * 9,
        out_specs=vspec,
    )(q_flat, q_hm, kvt, bias, w_kv, wo3, w1_t, w2_t, vecs)
    return out_flat.reshape(N, S, E)


def reference_forward(value, key, query, mask, p, mm_dtype=jnp.float32):
    """Pure-JAX reference reproducing the PyTorch forward (eval mode).

    mm_dtype controls the matmul-input precision so the same code provides both the
    exact-f32 reference and a bf16-matmul-matched reference.
    """
    N, S, E = query.shape
    H, D = HEADS, HEAD_DIM
    c = lambda a: a.astype(mm_dtype)
    keys = jnp.einsum('nse,fe->nsf', c(key), c(p["wk"]),
                      preferred_element_type=jnp.float32) + p["bk"][0]
    vals = jnp.einsum('nse,fe->nsf', c(value), c(p["wv"]),
                      preferred_element_type=jnp.float32) + p["bv"][0]
    q4 = query.reshape(N, S, H, D)      # raw query (module overwrites the projection)
    k4 = keys.reshape(N, S, H, D)
    v4 = vals.reshape(N, S, H, D)
    energy = jnp.einsum('nqhd,nkhd->nhqk', c(q4), c(k4),
                        preferred_element_type=jnp.float32)
    energy = jnp.where(mask == 0, jnp.float32(-1e20), energy)
    attn = jax.nn.softmax(energy / math.sqrt(E), axis=3)
    out = jnp.einsum('nhql,nlhd->nqhd', c(attn), c(v4),
                     preferred_element_type=jnp.float32).reshape(N, S, E)
    out = jnp.einsum('nse,fe->nsf', c(out), c(p["wo"]),
                     preferred_element_type=jnp.float32) + p["bo"][0]
    x = _layernorm(out + query, p["g1"][0], p["be1"][0])
    h1 = jnp.maximum(jnp.einsum('nse,fe->nsf', c(x), c(p["w1"]),
                                preferred_element_type=jnp.float32) + p["b1"][0], 0.0)
    ff = jnp.einsum('nsf,ef->nse', c(h1), c(p["w2"]),
                    preferred_element_type=jnp.float32) + p["b2"][0]
    return _layernorm(ff + x, p["g2"][0], p["be2"][0])


def make_params(rng):
    keys = jax.random.split(rng, 5)

    def lin(k, out_f, in_f):
        kw, kb = jax.random.split(k)
        bound = 1.0 / math.sqrt(in_f)
        w = jax.random.uniform(kw, (out_f, in_f), jnp.float32, -bound, bound)
        b = jax.random.uniform(kb, (1, out_f), jnp.float32, -bound, bound)
        return w, b

    wk, bk = lin(keys[0], EMBED, EMBED)
    wv, bv = lin(keys[1], EMBED, EMBED)
    wo, bo = lin(keys[2], EMBED, EMBED)
    w1, b1 = lin(keys[3], HIDDEN, EMBED)
    w2, b2 = lin(keys[4], EMBED, HIDDEN)
    return dict(
        wk=wk, bk=bk, wv=wv, bv=bv, wo=wo, bo=bo,
        g1=jnp.ones((1, EMBED), jnp.float32), be1=jnp.zeros((1, EMBED), jnp.float32),
        w1=w1, b1=b1, w2=w2, b2=b2,
        g2=jnp.ones((1, EMBED), jnp.float32), be2=jnp.zeros((1, EMBED), jnp.float32),
    )


if __name__ == "__main__":
    root = jax.random.PRNGKey(0)
    k_p, k_v, k_k, k_q = jax.random.split(root, 4)

    params = make_params(k_p)
    value = jax.random.normal(k_v, (BATCH, SEQ, EMBED), jnp.float32)
    key = jax.random.normal(k_k, (BATCH, SEQ, EMBED), jnp.float32)
    query = jax.random.normal(k_q, (BATCH, SEQ, EMBED), jnp.float32)
    # causal mask, broadcast over heads: (N, 1, S, S)
    mask = jnp.broadcast_to(
        jnp.tril(jnp.ones((SEQ, SEQ), jnp.float32))[None, None],
        (BATCH, 1, SEQ, SEQ),
    )

    run = jax.jit(transformer_block)
    out = jax.block_until_ready(run(value, key, query, mask, params))
    assert out.shape == (BATCH, SEQ, EMBED)

    # 1) Structural check against a reference that uses the same bf16 matmul-input
    #    policy (tight tolerance; remaining diff is the EUP approx reciprocal plus
    #    summation-order effects).
    ref_bf16 = reference_forward(value, key, query, mask, params,
                                 mm_dtype=jnp.bfloat16)
    err_b = jnp.max(jnp.abs(out - ref_bf16))
    assert jnp.allclose(out, ref_bf16, atol=5e-3, rtol=5e-3), \
        f"bf16-matched reference mismatch, max abs err = {err_b}"

    # 2) Accuracy check against the exact f32 reference (looser tolerance: bf16 MXU
    #    inputs round activations/weights to ~8 mantissa bits).
    ref_f32 = reference_forward(value, key, query, mask, params,
                                mm_dtype=jnp.float32)
    err_f = jnp.max(jnp.abs(out - ref_f32))
    assert jnp.allclose(out, ref_f32, atol=6e-2, rtol=6e-2), \
        f"f32 reference mismatch, max abs err = {err_f}"

    print("KERNEL_OK")
</pallas_src>

<mosaic_0001>
module attributes {stable_mosaic.version = 11 : i64} {
  func.func @transformer_block_kernel(%arg0: memref<16x32xf32, #tpu.memory_space<vmem>>, %arg1: memref<4x16x8xbf16, #tpu.memory_space<vmem>>, %arg2: memref<2x32x16xbf16, #tpu.memory_space<vmem>>, %arg3: memref<16x16xf32, #tpu.memory_space<vmem>>, %arg4: memref<2x32x32xbf16, #tpu.memory_space<vmem>>, %arg5: memref<4x8x32xbf16, #tpu.memory_space<vmem>>, %arg6: memref<32x128xbf16, #tpu.memory_space<vmem>>, %arg7: memref<128x32xbf16, #tpu.memory_space<vmem>>, %arg8: memref<7x128xf32, #tpu.memory_space<vmem>>, %arg9: memref<16x32xf32, #tpu.memory_space<vmem>>) attributes {dimension_semantics = [], scalar_prefetch = 0 : i64, scratch_operands = 0 : i64, tpu.core_type = #tpu.core_type<tc>} {
    %c0 = arith.constant 0 : index
    %c0_0 = arith.constant 0 : index
    %0 = vector.load %arg0[%c0, %c0_0] : memref<16x32xf32, #tpu.memory_space<vmem>>, vector<16x32xf32>
    %c0_1 = arith.constant 0 : index
    %c0_2 = arith.constant 0 : index
    %1 = vector.load %arg8[%c0_1, %c0_2] : memref<7x128xf32, #tpu.memory_space<vmem>>, vector<7x128xf32>
    %2 = vector.extract_strided_slice %1 {offsets = [0, 0], sizes = [1, 32], strides = [1, 1]} : vector<7x128xf32> to vector<1x32xf32>
    %3 = vector.extract_strided_slice %1 {offsets = [1, 0], sizes = [1, 32], strides = [1, 1]} : vector<7x128xf32> to vector<1x32xf32>
    %4 = vector.extract_strided_slice %1 {offsets = [2, 0], sizes = [1, 32], strides = [1, 1]} : vector<7x128xf32> to vector<1x32xf32>
    %5 = vector.extract_strided_slice %1 {offsets = [3, 0], sizes = [1, 128], strides = [1, 1]} : vector<7x128xf32> to vector<1x128xf32>
    %6 = vector.extract_strided_slice %1 {offsets = [4, 0], sizes = [1, 32], strides = [1, 1]} : vector<7x128xf32> to vector<1x32xf32>
    %7 = vector.extract_strided_slice %1 {offsets = [5, 0], sizes = [1, 32], strides = [1, 1]} : vector<7x128xf32> to vector<1x32xf32>
    %8 = vector.extract_strided_slice %1 {offsets = [6, 0], sizes = [1, 32], strides = [1, 1]} : vector<7x128xf32> to vector<1x32xf32>
    %c0_3 = arith.constant 0 : index
    %c0_4 = arith.constant 0 : index
    %c0_5 = arith.constant 0 : index
    %9 = vector.load %arg4[%c0_3, %c0_4, %c0_5] : memref<2x32x32xbf16, #tpu.memory_space<vmem>>, vector<1x32x32xbf16>
    %10 = vector.shape_cast %9 : vector<1x32x32xbf16> to vector<32x32xbf16>
    %c0_6 = arith.constant 0 : index
    %c0_7 = arith.constant 0 : index
    %c0_8 = arith.constant 0 : index
    %11 = vector.load %arg2[%c0_6, %c0_7, %c0_8] : memref<2x32x16xbf16, #tpu.memory_space<vmem>>, vector<1x32x16xbf16>
    %12 = vector.shape_cast %11 : vector<1x32x16xbf16> to vector<32x16xbf16>
    %cst = arith.constant dense<0.000000e+00> : vector<32x16xf32>
    %13 = tpu.matmul %10, %12, %cst {dimension_numbers = #tpu.dot_dimension_numbers<[1], [0], [0], [1], [0, 0, 1, 1], [], []>} : vector<32x32xbf16>, vector<32x16xbf16>, vector<32x16xf32> -> vector<32x16xf32>
    %c1 = arith.constant 1 : index
    %c0_9 = arith.constant 0 : index
    %c0_10 = arith.constant 0 : index
    %14 = vector.load %arg4[%c1, %c0_9, %c0_10] : memref<2x32x32xbf16, #tpu.memory_space<vmem>>, vector<1x32x32xbf16>
    %15 = vector.shape_cast %14 : vector<1x32x32xbf16> to vector<32x32xbf16>
    %c1_11 = arith.constant 1 : index
    %c0_12 = arith.constant 0 : index
    %c0_13 = arith.constant 0 : index
    %16 = vector.load %arg2[%c1_11, %c0_12, %c0_13] : memref<2x32x16xbf16, #tpu.memory_space<vmem>>, vector<1x32x16xbf16>
    %17 = vector.shape_cast %16 : vector<1x32x16xbf16> to vector<32x16xbf16>
    %cst_14 = arith.constant dense<0.000000e+00> : vector<32x16xf32>
    %18 = tpu.matmul %15, %17, %cst_14 {dimension_numbers = #tpu.dot_dimension_numbers<[1], [0], [0], [1], [0, 0, 1, 1], [], []>} : vector<32x32xbf16>, vector<32x16xbf16>, vector<32x16xf32> -> vector<32x16xf32>
    %19 = vector.shape_cast %13 : vector<32x16xf32> to vector<4x8x16xf32>
    %20 = arith.truncf %19 : vector<4x8x16xf32> to vector<4x8x16xbf16>
    %21 = vector.shape_cast %18 : vector<32x16xf32> to vector<4x8x16xf32>
    %22 = arith.truncf %21 : vector<4x8x16xf32> to vector<4x8x16xbf16>
    %c0_15 = arith.constant 0 : index
    %c0_16 = arith.constant 0 : index
    %c0_17 = arith.constant 0 : index
    %23 = vector.load %arg1[%c0_15, %c0_16, %c0_17] : memref<4x16x8xbf16, #tpu.memory_space<vmem>>, vector<4x16x8xbf16>
    "tpu.trace_start"() <{level = 10 : i32, message = "hqd,hdk->hqk"}> : () -> ()
    %cst_18 = arith.constant dense<0.000000e+00> : vector<4x16x16xf32>
    %24 = tpu.matmul %23, %20, %cst_18 {dimension_numbers = #tpu.dot_dimension_numbers<[2], [1], [1], [2], [0, 0, 0, 1, 1, 2], [0], [0]>} : vector<4x16x8xbf16>, vector<4x8x16xbf16>, vector<4x16x16xf32> -> vector<4x16x16xf32>
    "tpu.trace_stop"() : () -> ()
    %c0_19 = arith.constant 0 : index
    %c0_20 = arith.constant 0 : index
    %25 = vector.load %arg3[%c0_19, %c0_20] : memref<16x16xf32, #tpu.memory_space<vmem>>, vector<16x16xf32>
    %26 = vector.shape_cast %25 : vector<16x16xf32> to vector<1x16x16xf32>
    %27 = vector.broadcast %26 : vector<1x16x16xf32> to vector<4x16x16xf32>
    %28 = arith.addf %24, %27 : vector<4x16x16xf32>
    %cst_21 = arith.constant 0.176776692 : f32
    %29 = vector.broadcast %cst_21 : f32 to vector<4x16x16xf32>
    %30 = arith.mulf %28, %29 : vector<4x16x16xf32>
    %cst_22 = arith.constant dense<0xFF800000> : vector<4x16xf32>
    %31 = vector.multi_reduction <maximumf>, %30, %cst_22 [2] : vector<4x16x16xf32> to vector<4x16xf32>
    %32 = vector.shape_cast %31 : vector<4x16xf32> to vector<4x16x1xf32>
    %33 = vector.broadcast %32 : vector<4x16x1xf32> to vector<4x16x16xf32>
    %34 = arith.subf %30, %33 : vector<4x16x16xf32>
    %35 = math.exp %34 : vector<4x16x16xf32>
    %cst_23 = arith.constant dense<0.000000e+00> : vector<4x16xf32>
    %36 = vector.multi_reduction <add>, %35, %cst_23 [2] : vector<4x16x16xf32> to vector<4x16xf32>
    %37 = vector.shape_cast %36 : vector<4x16xf32> to vector<4x16x1xf32>
    %38 = tpu.reciprocal %37 {approx = true} : vector<4x16x1xf32> -> vector<4x16x1xf32>
    %39 = vector.broadcast %38 : vector<4x16x1xf32> to vector<4x16x16xf32>
    %40 = arith.mulf %35, %39 : vector<4x16x16xf32>
    %41 = arith.truncf %40 : vector<4x16x16xf32> to vector<4x16x16xbf16>
    "tpu.trace_start"() <{level = 10 : i32, message = "hqk,hdk->hqd"}> : () -> ()
    %cst_24 = arith.constant dense<0.000000e+00> : vector<4x16x8xf32>
    %42 = tpu.matmul %41, %22, %cst_24 {dimension_numbers = #tpu.dot_dimension_numbers<[2], [2], [1], [1], [0, 0, 0, 1, 1, 1], [0], [0]>} : vector<4x16x16xbf16>, vector<4x8x16xbf16>, vector<4x16x8xf32> -> vector<4x16x8xf32>
    "tpu.trace_stop"() : () -> ()
    %43 = arith.truncf %42 : vector<4x16x8xf32> to vector<4x16x8xbf16>
    %c0_25 = arith.constant 0 : index
    %c0_26 = arith.constant 0 : index
    %c0_27 = arith.constant 0 : index
    %44 = vector.load %arg5[%c0_25, %c0_26, %c0_27] : memref<4x8x32xbf16, #tpu.memory_space<vmem>>, vector<4x8x32xbf16>
    "tpu.trace_start"() <{level = 10 : i32, message = "hqd,hde->hqe"}> : () -> ()
    %cst_28 = arith.constant dense<0.000000e+00> : vector<4x16x32xf32>
    %45 = tpu.matmul %43, %44, %cst_28 {dimension_numbers = #tpu.dot_dimension_numbers<[2], [1], [1], [2], [0, 0, 0, 1, 1, 2], [0], [0]>} : vector<4x16x8xbf16>, vector<4x8x32xbf16>, vector<4x16x32xf32> -> vector<4x16x32xf32>
    "tpu.trace_stop"() : () -> ()
    %cst_29 = arith.constant dense<0.000000e+00> : vector<16x32xf32>
    %46 = vector.multi_reduction <add>, %45, %cst_29 [0] : vector<4x16x32xf32> to vector<16x32xf32>
    %47 = vector.broadcast %2 : vector<1x32xf32> to vector<16x32xf32>
    %48 = arith.addf %46, %47 : vector<16x32xf32>
    %49 = arith.addf %48, %0 : vector<16x32xf32>
    %cst_30 = arith.constant dense<0.000000e+00> : vector<16xf32>
    %50 = vector.multi_reduction <add>, %49, %cst_30 [1] : vector<16x32xf32> to vector<16xf32>
    %51 = vector.shape_cast %50 : vector<16xf32> to vector<16x1xf32>
    %cst_31 = arith.constant 3.200000e+01 : f32
    %52 = vector.broadcast %cst_31 : f32 to vector<16x1xf32>
    %53 = arith.divf %51, %52 : vector<16x1xf32>
    %54 = vector.broadcast %53 : vector<16x1xf32> to vector<16x32xf32>
    %55 = arith.subf %49, %54 : vector<16x32xf32>
    %56 = arith.mulf %55, %55 : vector<16x32xf32>
    %cst_32 = arith.constant dense<0.000000e+00> : vector<16xf32>
    %57 = vector.multi_reduction <add>, %56, %cst_32 [1] : vector<16x32xf32> to vector<16xf32>
    %58 = vector.shape_cast %57 : vector<16xf32> to vector<16x1xf32>
    %cst_33 = arith.constant 3.200000e+01 : f32
    %59 = vector.broadcast %cst_33 : f32 to vector<16x1xf32>
    %60 = arith.divf %58, %59 : vector<16x1xf32>
    %61 = vector.broadcast %53 : vector<16x1xf32> to vector<16x32xf32>
    %62 = arith.subf %49, %61 : vector<16x32xf32>
    %cst_34 = arith.constant 9.99999974E-6 : f32
    %63 = vector.broadcast %cst_34 : f32 to vector<16x1xf32>
    %64 = arith.addf %60, %63 : vector<16x1xf32>
    %65 = math.rsqrt %64 : vector<16x1xf32>
    %66 = vector.broadcast %65 : vector<16x1xf32> to vector<16x32xf32>
    %67 = arith.mulf %62, %66 : vector<16x32xf32>
    %68 = vector.broadcast %3 : vector<1x32xf32> to vector<16x32xf32>
    %69 = arith.mulf %67, %68 : vector<16x32xf32>
    %70 = vector.broadcast %4 : vector<1x32xf32> to vector<16x32xf32>
    %71 = arith.addf %69, %70 : vector<16x32xf32>
    %72 = arith.truncf %71 : vector<16x32xf32> to vector<16x32xbf16>
    %c0_35 = arith.constant 0 : index
    %c0_36 = arith.constant 0 : index
    %73 = vector.load %arg6[%c0_35, %c0_36] : memref<32x128xbf16, #tpu.memory_space<vmem>>, vector<32x128xbf16>
    %cst_37 = arith.constant dense<0.000000e+00> : vector<16x128xf32>
    %74 = tpu.matmul %72, %73, %cst_37 {dimension_numbers = #tpu.dot_dimension_numbers<[1], [0], [0], [1], [0, 0, 1, 1], [], []>} : vector<16x32xbf16>, vector<32x128xbf16>, vector<16x128xf32> -> vector<16x128xf32>
    %75 = vector.broadcast %5 : vector<1x128xf32> to vector<16x128xf32>
    %76 = arith.addf %74, %75 : vector<16x128xf32>
    %cst_38 = arith.constant 0.000000e+00 : f32
    %77 = vector.broadcast %cst_38 : f32 to vector<16x128xf32>
    %78 = arith.maximumf %76, %77 : vector<16x128xf32>
    %79 = arith.truncf %78 : vector<16x128xf32> to vector<16x128xbf16>
    %c0_39 = arith.constant 0 : index
    %c0_40 = arith.constant 0 : index
    %80 = vector.load %arg7[%c0_39, %c0_40] : memref<128x32xbf16, #tpu.memory_space<vmem>>, vector<128x32xbf16>
    %cst_41 = arith.constant dense<0.000000e+00> : vector<16x32xf32>
    %81 = tpu.matmul %79, %80, %cst_41 {dimension_numbers = #tpu.dot_dimension_numbers<[1], [0], [0], [1], [0, 0, 1, 1], [], []>} : vector<16x128xbf16>, vector<128x32xbf16>, vector<16x32xf32> -> vector<16x32xf32>
    %82 = vector.broadcast %6 : vector<1x32xf32> to vector<16x32xf32>
    %83 = arith.addf %81, %82 : vector<16x32xf32>
    %84 = arith.addf %83, %71 : vector<16x32xf32>
    %cst_42 = arith.constant dense<0.000000e+00> : vector<16xf32>
    %85 = vector.multi_reduction <add>, %84, %cst_42 [1] : vector<16x32xf32> to vector<16xf32>
    %86 = vector.shape_cast %85 : vector<16xf32> to vector<16x1xf32>
    %cst_43 = arith.constant 3.200000e+01 : f32
    %87 = vector.broadcast %cst_43 : f32 to vector<16x1xf32>
    %88 = arith.divf %86, %87 : vector<16x1xf32>
    %89 = vector.broadcast %88 : vector<16x1xf32> to vector<16x32xf32>
    %90 = arith.subf %84, %89 : vector<16x32xf32>
    %91 = arith.mulf %90, %90 : vector<16x32xf32>
    %cst_44 = arith.constant dense<0.000000e+00> : vector<16xf32>
    %92 = vector.multi_reduction <add>, %91, %cst_44 [1] : vector<16x32xf32> to vector<16xf32>
    %93 = vector.shape_cast %92 : vector<16xf32> to vector<16x1xf32>
    %cst_45 = arith.constant 3.200000e+01 : f32
    %94 = vector.broadcast %cst_45 : f32 to vector<16x1xf32>
    %95 = arith.divf %93, %94 : vector<16x1xf32>
    %96 = vector.broadcast %88 : vector<16x1xf32> to vector<16x32xf32>
    %97 = arith.subf %84, %96 : vector<16x32xf32>
    %cst_46 = arith.constant 9.99999974E-6 : f32
    %98 = vector.broadcast %cst_46 : f32 to vector<16x1xf32>
    %99 = arith.addf %95, %98 : vector<16x1xf32>
    %100 = math.rsqrt %99 : vector<16x1xf32>
    %101 = vector.broadcast %100 : vector<16x1xf32> to vector<16x32xf32>
    %102 = arith.mulf %97, %101 : vector<16x32xf32>
    %103 = vector.broadcast %7 : vector<1x32xf32> to vector<16x32xf32>
    %104 = arith.mulf %102, %103 : vector<16x32xf32>
    %105 = vector.broadcast %8 : vector<1x32xf32> to vector<16x32xf32>
    %106 = arith.addf %104, %105 : vector<16x32xf32>
    %c0_47 = arith.constant 0 : index
    %c0_48 = arith.constant 0 : index
    %107 = vector.load %arg9[%c0_47, %c0_48] : memref<16x32xf32, #tpu.memory_space<vmem>>, vector<16x32xf32>
    tpu.vector_store %arg9[%c0_47, %c0_48], %106 {strides = array<i32>} : memref<16x32xf32, #tpu.memory_space<vmem>>, vector<16x32xf32>,
    return
  }
}

</mosaic_0001>

<llo_original>
// kernel: transformer_block.1
$region0: #{transformer_block.1}
  #allocation0 [shape = 'u32[]', space=smem, size = 0x4, offset = 0x4, fixed_abs, tag = 'smem constant byte address 0x4 - core index']
  #allocation1 [shape = 'u32[144,128]{1,0:T(1,128)}', space=vmem, size = 0x12000, scoped, tag = 'internal scratch']
  %s0 = inlined_call_operand.vmem [shape: f32[16,32], index: 0, kind: input, shape index: {}]
  %s1 = inlined_call_operand.vmem [shape: bf16[4,16,8], index: 1, kind: input, shape index: {}]
  %s2 = inlined_call_operand.vmem [shape: bf16[2,32,16], index: 2, kind: input, shape index: {}]
  %s3 = inlined_call_operand.vmem [shape: f32[16,16], index: 3, kind: input, shape index: {}]
  %s4 = inlined_call_operand.vmem [shape: bf16[2,32,32], index: 4, kind: input, shape index: {}]
  %s5 = inlined_call_operand.vmem [shape: bf16[4,8,32], index: 5, kind: input, shape index: {}]
  %s6 = inlined_call_operand.vmem [shape: bf16[32,128], index: 6, kind: input, shape index: {}]
  %s7 = inlined_call_operand.vmem [shape: bf16[128,32], index: 7, kind: input, shape index: {}]
  %s8 = inlined_call_operand.vmem [shape: f32[7,128], index: 8, kind: input, shape index: {}]
  %s9 = inlined_call_operand.hbm [shape: f32[16,32], index: 9, kind: output, shape index: {}]
  %s10 = sld [smem:[#allocation0]]
  $region46: #{transformer_block.1} parent=0
    _
  %s12 = ssub.s32 1, %s10
  %s13 = scalar_select 0, %s12, %s10
  $region1: #{transformer_block.1} parent=0
    #allocation2 [shape = 'u8[8192]{0}', space=vmem, size = 0x2000, scoped, tag = 'output window, operand 0, single buffered']
    #allocation3 [shape = 's32[1]{0}', space=sflag, size = 0x4, scoped, tag = 'scoped memory for transformer_block.1']
    %14 = vsyncpa [#allocation3], 0
    // Predicated region
    $region2: #{transformer_block.1} parent=1 // pred_check
      _
    $region3: #{transformer_block.1} parent=1 // pred_check_branch
      %16 = sbr.rel (0) target = $region5
    $region4: #{transformer_block.1} parent=1 // pred_region
      _
    $region5: #{transformer_block.1} parent=1 // pred_fallthru
      _
    // Predicated region
    $region6: #{transformer_block.1} parent=1 // pred_check
      _
    $region7: #{transformer_block.1} parent=1 // pred_check_branch
      %18 = sbr.rel (0) target = $region9
    $region8: #{transformer_block.1} parent=1 // pred_region
      _
    $region9: #{transformer_block.1} parent=1 // pred_fallthru
      _
    // Predicated region
    $region10: #{transformer_block.1} parent=1 // pred_check
      _
    $region11: #{transformer_block.1} parent=1 // pred_check_branch
      %20 = sbr.rel (0) target = $region13
    $region12: #{transformer_block.1} parent=1 // pred_region
      _
    $region13: #{transformer_block.1} parent=1 // pred_fallthru
      _
    // Predicated region
    $region14: #{transformer_block.1} parent=1 // pred_check
      _
    $region15: #{transformer_block.1} parent=1 // pred_check_branch
      %22 = sbr.rel (0) target = $region17
    $region16: #{transformer_block.1} parent=1 // pred_region
      _
    $region17: #{transformer_block.1} parent=1 // pred_fallthru
      _
    // Predicated region
    $region18: #{transformer_block.1} parent=1 // pred_check
      _
    $region19: #{transformer_block.1} parent=1 // pred_check_branch
      %24 = sbr.rel (0) target = $region21
    $region20: #{transformer_block.1} parent=1 // pred_region
      _
    $region21: #{transformer_block.1} parent=1 // pred_fallthru
      _
    // Predicated region
    $region22: #{transformer_block.1} parent=1 // pred_check
      _
    $region23: #{transformer_block.1} parent=1 // pred_check_branch
      %26 = sbr.rel (0) target = $region25
    $region24: #{transformer_block.1} parent=1 // pred_region
      _
    $region25: #{transformer_block.1} parent=1 // pred_fallthru
      _
    // Predicated region
    $region26: #{transformer_block.1} parent=1 // pred_check
      _
    $region27: #{transformer_block.1} parent=1 // pred_check_branch
      %28 = sbr.rel (0) target = $region29
    $region28: #{transformer_block.1} parent=1 // pred_region
      _
    $region29: #{transformer_block.1} parent=1 // pred_fallthru
      _
    // Predicated region
    $region30: #{transformer_block.1} parent=1 // pred_check
      _
    $region31: #{transformer_block.1} parent=1 // pred_check_branch
      %30 = sbr.rel (0) target = $region33
    $region32: #{transformer_block.1} parent=1 // pred_region
      _
    $region33: #{transformer_block.1} parent=1 // pred_fallthru
      _
    // Predicated region
    $region34: #{transformer_block.1} parent=1 // pred_check
      _
    $region35: #{transformer_block.1} parent=1 // pred_check_branch
      %32 = sbr.rel (0) target = $region37
    $region36: #{transformer_block.1} parent=1 // pred_region
      _
    $region37: #{transformer_block.1} parent=1 // pred_fallthru
      _
    %v34 = vld [vmem:[%s0] sm:$0xff]
    %v35 = vld [vmem:[%s0 + $0x8] sm:$0xff]
    %v36 = vld [vmem:[%s8] sm:$0x7f]
    %v37 = vld [vmem:[%s4] sm:$0xf]
    %v38 = vld [vmem:[%s4 + $0x4] sm:$0xf]
    %v39 = vld [vmem:[%s4 + $0x8] sm:$0xf]
    %v40 = vld [vmem:[%s4 + $0xc] sm:$0xf]
    %v41 = vld [vmem:[%s2] sm:$0xf]
    %v42 = vld [vmem:[%s2 + $0x4] sm:$0xf]
    %v43 = vld [vmem:[%s2 + $0x8] sm:$0xf]
    %v44 = vld [vmem:[%s2 + $0xc] sm:$0xf]
    %v49 = vunpack.c.l.b16 %v37
    %v50 = vunpack.c.l.b16 %v38
    %v51 = vunpack.c.l.b16 %v39
    %v52 = vunpack.c.l.b16 %v40
    %v53 = vpack.c.b16 %v50, %v49
    %v54 = vpack.c.b16 %v52, %v51
    %v59 = vunpack.c.l.b16 %v41
    %v60 = vunpack.c.l.b16 %v42
    %v61 = vunpack.c.l.b16 %v43
    %v62 = vunpack.c.l.b16 %v44
    %v63 = vpack.c.b16 %v60, %v59
    %v64 = vpack.c.b16 %v62, %v61
    %vm67 = vcmask 261120
    %v69 = vsel %vm67, %v53, 0
    %v72 = vsel %vm67, %v54, 0
    %74 = vmatprep.subr.bf16.mxu0 0
    %75 = vmatpush1.bf16.msra.mxu0 %v63
    %76 = vmatprep.subr.bf16.mxu0 0
    %77 = vmatpush1.bf16.msra.mxu0 %v64
    %78 = vmatprep.subr.bf16.mxu0 0
    %79 = vmatpush1.bf16.msra.mxu0 0
    %80 = vmatprep.subr.bf16.mxu0 0
    %81 = vmatpush1.bf16.msra.mxu0 0
    %82 = vmatprep.subr.bf16.mxu0 0
    %83 = vmatpush1.bf16.msra.mxu0 0
    %84 = vmatprep.subr.bf16.mxu0 0
    %85 = vmatpush1.bf16.msra.mxu0 0
    %86 = vmatprep.subr.bf16.mxu0 0
    %87 = vmatpush1.bf16.msra.mxu0 0
    %88 = vmatprep.subr.bf16.mxu0 0
    %89 = vmatpush1.bf16.msra.mxu0 0
    %90 = vmatprep.subr.bf16.mxu0 0
    %91 = vmatpush1.bf16.msra.mxu0 0
    %92 = vmatprep.subr.bf16.mxu0 0
    %93 = vmatpush1.bf16.msra.mxu0 0
    %94 = vmatprep.subr.bf16.mxu0 0
    %95 = vmatpush1.bf16.msra.mxu0 0
    %96 = vmatprep.subr.bf16.mxu0 0
    %97 = vmatpush1.bf16.msra.mxu0 0
    %98 = vmatprep.subr.bf16.mxu0 0
    %99 = vmatpush1.bf16.msra.mxu0 0
    %100 = vmatprep.subr.bf16.mxu0 0
    %101 = vmatpush1.bf16.msra.mxu0 0
    %102 = vmatprep.subr.bf16.mxu0 0
    %103 = vmatpush1.bf16.msra.mxu0 0
    %104 = vmatprep.subr.bf16.mxu0 0
    %105 = vmatpush1.bf16.msra.mxu0 0
    %106 = vmatprep.mubr.bf16.mxu0 0
    %107 = vmatmul.mubr.bf16.gmra.mrb[0].mxu0 %v69
    %v108 = vpop.f32.mrb[0].mxu0
    %v109 = vadd.f32 0.0, %v108
    %v110 = vpop.f32.mrb[0].mxu0
    %v111 = vpop.f32.mrb[0].mxu0
    %v112 = vadd.f32 0.0, %v111
    %v113 = vpop.f32.mrb[0].mxu0
    %114 = vmatprep.mubr.bf16.mxu0 0
    %115 = vmatmul.mubr.bf16.gmra.mrb[0].mxu0 %v72
    %v116 = vpop.f32.mrb[0].mxu0
    %v117 = vadd.f32 0.0, %v116
    %v118 = vpop.f32.mrb[0].mxu0
    %v119 = vpop.f32.mrb[0].mxu0
    %v120 = vadd.f32 0.0, %v119
    %v121 = vpop.f32.mrb[0].mxu0
    %122 = vdwg.mxu0
    %s123 = scalar_lea.vmem %s4, 16
    %v124 = vld [vmem:[%s123] sm:$0xf]
    %v125 = vld [vmem:[%s123 + $0x4] sm:$0xf]
    %v126 = vld [vmem:[%s123 + $0x8] sm:$0xf]
    %v127 = vld [vmem:[%s123 + $0xc] sm:$0xf]
    %s128 = scalar_lea.vmem %s2, 16
    %v129 = vld [vmem:[%s128] sm:$0xf]
    %v130 = vld [vmem:[%s128 + $0x4] sm:$0xf]
    %v131 = vld [vmem:[%s128 + $0x8] sm:$0xf]
    %v132 = vld [vmem:[%s128 + $0xc] sm:$0xf]
    %v137 = vunpack.c.l.b16 %v124
    %v138 = vunpack.c.l.b16 %v125
    %v139 = vunpack.c.l.b16 %v126
    %v140 = vunpack.c.l.b16 %v127
    %v141 = vpack.c.b16 %v138, %v137
    %v142 = vpack.c.b16 %v140, %v139
    %v147 = vunpack.c.l.b16 %v129
    %v148 = vunpack.c.l.b16 %v130
    %v149 = vunpack.c.l.b16 %v131
    %v150 = vunpack.c.l.b16 %v132
    %v151 = vpack.c.b16 %v148, %v147
    %v152 = vpack.c.b16 %v150, %v149
    %v156 = vsel %vm67, %v141, 0
    %v159 = vsel %vm67, %v142, 0
    %161 = vmatprep.subr.bf16.mxu0 0
    %162 = vmatpush1.bf16.msra.mxu0 %v151
    %163 = vmatprep.subr.bf16.mxu0 0
    %164 = vmatpush1.bf16.msra.mxu0 %v152
    %165 = vmatprep.subr.bf16.mxu0 0
    %166 = vmatpush1.bf16.msra.mxu0 0
    %167 = vmatprep.subr.bf16.mxu0 0
    %168 = vmatpush1.bf16.msra.mxu0 0
    %169 = vmatprep.subr.bf16.mxu0 0
    %170 = vmatpush1.bf16.msra.mxu0 0
    %171 = vmatprep.subr.bf16.mxu0 0
    %172 = vmatpush1.bf16.msra.mxu0 0
    %173 = vmatprep.subr.bf16.mxu0 0
    %174 = vmatpush1.bf16.msra.mxu0 0
    %175 = vmatprep.subr.bf16.mxu0 0
    %176 = vmatpush1.bf16.msra.mxu0 0
    %177 = vmatprep.subr.bf16.mxu0 0
    %178 = vmatpush1.bf16.msra.mxu0 0
    %179 = vmatprep.subr.bf16.mxu0 0
    %180 = vmatpush1.bf16.msra.mxu0 0
    %181 = vmatprep.subr.bf16.mxu0 0
    %182 = vmatpush1.bf16.msra.mxu0 0
    %183 = vmatprep.subr.bf16.mxu0 0
    %184 = vmatpush1.bf16.msra.mxu0 0
    %185 = vmatprep.subr.bf16.mxu0 0
    %186 = vmatpush1.bf16.msra.mxu0 0
    %187 = vmatprep.subr.bf16.mxu0 0
    %188 = vmatpush1.bf16.msra.mxu0 0
    %189 = vmatprep.subr.bf16.mxu0 0
    %190 = vmatpush1.bf16.msra.mxu0 0
    %191 = vmatprep.subr.bf16.mxu0 0
    %192 = vmatpush1.bf16.msra.mxu0 0
    %193 = vmatprep.mubr.bf16.mxu0 0
    %194 = vmatmul.mubr.bf16.gmra.mrb[0].mxu0 %v156
    %v195 = vpop.f32.mrb[0].mxu0
    %v196 = vadd.f32 0.0, %v195
    %v197 = vpop.f32.mrb[0].mxu0
    %v198 = vpop.f32.mrb[0].mxu0
    %v199 = vadd.f32 0.0, %v198
    %v200 = vpop.f32.mrb[0].mxu0
    %201 = vmatprep.mubr.bf16.mxu0 0
    %202 = vmatmul.mubr.bf16.gmra.mrb[0].mxu0 %v159
    %v203 = vpop.f32.mrb[0].mxu0
    %v204 = vadd.f32 0.0, %v203
    %v205 = vpop.f32.mrb[0].mxu0
    %v206 = vpop.f32.mrb[0].mxu0
    %v207 = vadd.f32 0.0, %v206
    %v208 = vpop.f32.mrb[0].mxu0
    %209 = vdwg.mxu0
    %v210 = vpack.c.bf16 %v109, %v109
    %v211 = vpack.c.bf16 %v112, %v112
    %v212 = vpack.c.bf16 %v117, %v117
    %v213 = vpack.c.bf16 %v120, %v120
    %v214 = vpack.c.bf16 %v196, %v196
    %v215 = vpack.c.bf16 %v199, %v199
    %v216 = vpack.c.bf16 %v204, %v204
    %v217 = vpack.c.bf16 %v207, %v207
    %v218 = vld [vmem:[%s1] sm:$0xf]
    %v219 = vld [vmem:[%s1 + $0x4] sm:$0xf]
    %v220 = vld [vmem:[%s1 + $0x8] sm:$0xf]
    %v221 = vld [vmem:[%s1 + $0xc] sm:$0xf]
    %v222 = vld [vmem:[%s1 + $0x10] sm:$0xf]
    %v223 = vld [vmem:[%s1 + $0x14] sm:$0xf]
    %v224 = vld [vmem:[%s1 + $0x18] sm:$0xf]
    %v225 = vld [vmem:[%s1 + $0x1c] sm:$0xf]
    %v226 = vld [vmem:[%s3] sm:$0xff]
    %v227 = vld [vmem:[%s3 + $0x8] sm:$0xff]
    %v230 = vunpack.c.l.b16 %v218
    %v231 = vunpack.c.l.b16 %v219
    %v232 = vpack.c.b16 %v231, %v230
    %vm233 = vcmask 64512
    %v235 = vsel %vm233, %v232, 0
    %vm237 = vcmask 1043456
    %v239 = vsel %vm237, %v210, 0
    %241 = vmatprep.subr.bf16.mxu0 0
    %242 = vmatpush1.bf16.msra.mxu0 %v239
    %243 = vmatprep.subr.bf16.mxu0 0
    %244 = vmatpush1.bf16.msra.mxu0 0
    %245 = vmatprep.subr.bf16.mxu0 0
    %246 = vmatpush1.bf16.msra.mxu0 0
    %247 = vmatprep.subr.bf16.mxu0 0
    %248 = vmatpush1.bf16.msra.mxu0 0
    %249 = vmatprep.subr.bf16.mxu0 0
    %250 = vmatpush1.bf16.msra.mxu0 0
    %251 = vmatprep.subr.bf16.mxu0 0
    %252 = vmatpush1.bf16.msra.mxu0 0
    %253 = vmatprep.subr.bf16.mxu0 0
    %254 = vmatpush1.bf16.msra.mxu0 0
    %255 = vmatprep.subr.bf16.mxu0 0
    %256 = vmatpush1.bf16.msra.mxu0 0
    %257 = vmatprep.subr.bf16.mxu0 0
    %258 = vmatpush1.bf16.msra.mxu0 0
    %259 = vmatprep.subr.bf16.mxu0 0
    %260 = vmatpush1.bf16.msra.mxu0 0
    %261 = vmatprep.subr.bf16.mxu0 0
    %262 = vmatpush1.bf16.msra.mxu0 0
    %263 = vmatprep.subr.bf16.mxu0 0
    %264 = vmatpush1.bf16.msra.mxu0 0
    %265 = vmatprep.subr.bf16.mxu0 0
    %266 = vmatpush1.bf16.msra.mxu0 0
    %267 = vmatprep.subr.bf16.mxu0 0
    %268 = vmatpush1.bf16.msra.mxu0 0
    %269 = vmatprep.subr.bf16.mxu0 0
    %270 = vmatpush1.bf16.msra.mxu0 0
    %271 = vmatprep.subr.bf16.mxu0 0
    %272 = vmatpush1.bf16.msra.mxu0 0
    %273 = vmatprep.mubr.bf16.mxu0 0
    %274 = vmatmul.mubr.bf16.gmra.mrb[0].mxu0 %v235
    %v275 = vpop.f32.mrb[0].mxu0
    %v276 = vadd.f32 %v226, %v275
    %v277 = vpop.f32.mrb[0].mxu0
    %v278 = vpop.f32.mrb[0].mxu0
    %v279 = vadd.f32 %v227, %v278
    %v280 = vpop.f32.mrb[0].mxu0
    %281 = vdwg.mxu0
    %v284 = vunpack.c.l.b16 %v220
    %v285 = vunpack.c.l.b16 %v221
    %v286 = vpack.c.b16 %v285, %v284
    %v288 = vsel %vm233, %v286, 0
    %v291 = vsel %vm237, %v211, 0
    %293 = vmatprep.subr.bf16.mxu0 0
    %294 = vmatpush1.bf16.msra.mxu0 %v291
    %295 = vmatprep.subr.bf16.mxu0 0
    %296 = vmatpush1.bf16.msra.mxu0 0
    %297 = vmatprep.subr.bf16.mxu0 0
    %298 = vmatpush1.bf16.msra.mxu0 0
    %299 = vmatprep.subr.bf16.mxu0 0
    %300 = vmatpush1.bf16.msra.mxu0 0
    %301 = vmatprep.subr.bf16.mxu0 0
    %302 = vmatpush1.bf16.msra.mxu0 0
    %303 = vmatprep.subr.bf16.mxu0 0
    %304 = vmatpush1.bf16.msra.mxu0 0
    %305 = vmatprep.subr.bf16.mxu0 0
    %306 = vmatpush1.bf16.msra.mxu0 0
    %307 = vmatprep.subr.bf16.mxu0 0
    %308 = vmatpush1.bf16.msra.mxu0 0
    %309 = vmatprep.subr.bf16.mxu0 0
    %310 = vmatpush1.bf16.msra.mxu0 0
    %311 = vmatprep.subr.bf16.mxu0 0
    %312 = vmatpush1.bf16.msra.mxu0 0
    %313 = vmatprep.subr.bf16.mxu0 0
    %314 = vmatpush1.bf16.msra.mxu0 0
    %315 = vmatprep.subr.bf16.mxu0 0
    %316 = vmatpush1.bf16.msra.mxu0 0
    %317 = vmatprep.subr.bf16.mxu0 0
    %318 = vmatpush1.bf16.msra.mxu0 0
    %319 = vmatprep.subr.bf16.mxu0 0
    %320 = vmatpush1.bf16.msra.mxu0 0
    %321 = vmatprep.subr.bf16.mxu0 0
    %322 = vmatpush1.bf16.msra.mxu0 0
    %323 = vmatprep.subr.bf16.mxu0 0
    %324 = vmatpush1.bf16.msra.mxu0 0
    %325 = vmatprep.mubr.bf16.mxu0 0
    %326 = vmatmul.mubr.bf16.gmra.mrb[0].mxu0 %v288
    %v327 = vpop.f32.mrb[0].mxu0
    %v328 = vadd.f32 %v226, %v327
    %v329 = vpop.f32.mrb[0].mxu0
    %v330 = vpop.f32.mrb[0].mxu0
    %v331 = vadd.f32 %v227, %v330
    %v332 = vpop.f32.mrb[0].mxu0
    %333 = vdwg.mxu0
    %v336 = vunpack.c.l.b16 %v222
    %v337 = vunpack.c.l.b16 %v223
    %v338 = vpack.c.b16 %v337, %v336
    %v340 = vsel %vm233, %v338, 0
    %v343 = vsel %vm237, %v212, 0
    %345 = vmatprep.subr.bf16.mxu0 0
    %346 = vmatpush1.bf16.msra.mxu0 %v343
    %347 = vmatprep.subr.bf16.mxu0 0
    %348 = vmatpush1.bf16.msra.mxu0 0
    %349 = vmatprep.subr.bf16.mxu0 0
    %350 = vmatpush1.bf16.msra.mxu0 0
    %351 = vmatprep.subr.bf16.mxu0 0
    %352 = vmatpush1.bf16.msra.mxu0 0
    %353 = vmatprep.subr.bf16.mxu0 0
    %354 = vmatpush1.bf16.msra.mxu0 0
    %355 = vmatprep.subr.bf16.mxu0 0
    %356 = vmatpush1.bf16.msra.mxu0 0
    %357 = vmatprep.subr.bf16.mxu0 0
    %358 = vmatpush1.bf16.msra.mxu0 0
    %359 = vmatprep.subr.bf16.mxu0 0
    %360 = vmatpush1.bf16.msra.mxu0 0
    %361 = vmatprep.subr.bf16.mxu0 0
    %362 = vmatpush1.bf16.msra.mxu0 0
    %363 = vmatprep.subr.bf16.mxu0 0
    %364 = vmatpush1.bf16.msra.mxu0 0
    %365 = vmatprep.subr.bf16.mxu0 0
    %366 = vmatpush1.bf16.msra.mxu0 0
    %367 = vmatprep.subr.bf16.mxu0 0
    %368 = vmatpush1.bf16.msra.mxu0 0
    %369 = vmatprep.subr.bf16.mxu0 0
    %370 = vmatpush1.bf16.msra.mxu0 0
    %371 = vmatprep.subr.bf16.mxu0 0
    %372 = vmatpush1.bf16.msra.mxu0 0
    %373 = vmatprep.subr.bf16.mxu0 0
    %374 = vmatpush1.bf16.msra.mxu0 0
    %375 = vmatprep.subr.bf16.mxu0 0
    %376 = vmatpush1.bf16.msra.mxu0 0
    %377 = vmatprep.mubr.bf16.mxu0 0
    %378 = vmatmul.mubr.bf16.gmra.mrb[0].mxu0 %v340
    %v379 = vpop.f32.mrb[0].mxu0
    %v380 = vadd.f32 %v226, %v379
    %v381 = vpop.f32.mrb[0].mxu0
    %v382 = vpop.f32.mrb[0].mxu0
    %v383 = vadd.f32 %v227, %v382
    %v384 = vpop.f32.mrb[0].mxu0
    %385 = vdwg.mxu0
    %v388 = vunpack.c.l.b16 %v224
    %v389 = vunpack.c.l.b16 %v225
    %v390 = vpack.c.b16 %v389, %v388
    %v392 = vsel %vm233, %v390, 0
    %v395 = vsel %vm237, %v213, 0
    %397 = vmatprep.subr.bf16.mxu0 0
    %398 = vmatpush1.bf16.msra.mxu0 %v395
    %399 = vmatprep.subr.bf16.mxu0 0
    %400 = vmatpush1.bf16.msra.mxu0 0
    %401 = vmatprep.subr.bf16.mxu0 0
    %402 = vmatpush1.bf16.msra.mxu0 0
    %403 = vmatprep.subr.bf16.mxu0 0
    %404 = vmatpush1.bf16.msra.mxu0 0
    %405 = vmatprep.subr.bf16.mxu0 0
    %406 = vmatpush1.bf16.msra.mxu0 0
    %407 = vmatprep.subr.bf16.mxu0 0
    %408 = vmatpush1.bf16.msra.mxu0 0
    %409 = vmatprep.subr.bf16.mxu0 0
    %410 = vmatpush1.bf16.msra.mxu0 0
    %411 = vmatprep.subr.bf16.mxu0 0
    %412 = vmatpush1.bf16.msra.mxu0 0
    %413 = vmatprep.subr.bf16.mxu0 0
    %414 = vmatpush1.bf16.msra.mxu0 0
    %415 = vmatprep.subr.bf16.mxu0 0
    %416 = vmatpush1.bf16.msra.mxu0 0
    %417 = vmatprep.subr.bf16.mxu0 0
    %418 = vmatpush1.bf16.msra.mxu0 0
    %419 = vmatprep.subr.bf16.mxu0 0
    %420 = vmatpush1.bf16.msra.mxu0 0
    %421 = vmatprep.subr.bf16.mxu0 0
    %422 = vmatpush1.bf16.msra.mxu0 0
    %423 = vmatprep.subr.bf16.mxu0 0
    %424 = vmatpush1.bf16.msra.mxu0 0
    %425 = vmatprep.subr.bf16.mxu0 0
    %426 = vmatpush1.bf16.msra.mxu0 0
    %427 = vmatprep.subr.bf16.mxu0 0
    %428 = vmatpush1.bf16.msra.mxu0 0
    %429 = vmatprep.mubr.bf16.mxu0 0
    %430 = vmatmul.mubr.bf16.gmra.mrb[0].mxu0 %v392
    %v431 = vpop.f32.mrb[0].mxu0
    %v432 = vadd.f32 %v226, %v431
    %v433 = vpop.f32.mrb[0].mxu0
    %v434 = vpop.f32.mrb[0].mxu0
    %v435 = vadd.f32 %v227, %v434
    %v436 = vpop.f32.mrb[0].mxu0
    %437 = vdwg.mxu0
    %v438 = vmul.f32 %v276, 0.17677669
    %v439 = vmul.f32 %v279, 0.17677669
    %v440 = vmul.f32 %v328, 0.17677669
    %v441 = vmul.f32 %v331, 0.17677669
    %v442 = vmul.f32 %v380, 0.17677669
    %v443 = vmul.f32 %v383, 0.17677669
    %v444 = vmul.f32 %v432, 0.17677669
    %v445 = vmul.f32 %v435, 0.17677669
    %vm446 = vcmask 130048
    %v447 = vsel %vm446, %v438, -inf
    %448 = vmax.xlane.f32.xlu0 %v447
    %v449 = vpop.xlane.xlu0 %448
    %v450 = vsel %vm446, %v439, -inf
    %451 = vmax.xlane.f32.xlu0 %v450
    %v452 = vpop.xlane.xlu0 %451
    %v453 = vsel %vm446, %v440, -inf
    %454 = vmax.xlane.f32.xlu0 %v453
    %v455 = vpop.xlane.xlu0 %454
    %v456 = vsel %vm446, %v441, -inf
    %457 = vmax.xlane.f32.xlu0 %v456
    %v458 = vpop.xlane.xlu0 %457
    %v459 = vsel %vm446, %v442, -inf
    %460 = vmax.xlane.f32.xlu0 %v459
    %v461 = vpop.xlane.xlu0 %460
    %v462 = vsel %vm446, %v443, -inf
    %463 = vmax.xlane.f32.xlu0 %v462
    %v464 = vpop.xlane.xlu0 %463
    %v465 = vsel %vm446, %v444, -inf
    %466 = vmax.xlane.f32.xlu0 %v465
    %v467 = vpop.xlane.xlu0 %466
    %v468 = vsel %vm446, %v445, -inf
    %469 = vmax.xlane.f32.xlu0 %v468
    %v470 = vpop.xlane.xlu0 %469
    %v471 = vsub.f32 %v438, %v449
    %v472 = vsub.f32 %v439, %v452
    %v473 = vsub.f32 %v440, %v455
    %v474 = vsub.f32 %v441, %v458
    %v475 = vsub.f32 %v442, %v461
    %v476 = vsub.f32 %v443, %v464
    %v477 = vsub.f32 %v444, %v467
    %v478 = vsub.f32 %v445, %v470
    %v479 = vmul.f32 %v471, 1.442695
    %v480 = vpow.pop %v479
    %v481 = vmul.f32 %v472, 1.442695
    %v482 = vpow.pop %v481
    %v483 = vmul.f32 %v473, 1.442695
    %v484 = vpow.pop %v483
    %v485 = vmul.f32 %v474, 1.442695
    %v486 = vpow.pop %v485
    %v487 = vmul.f32 %v475, 1.442695
    %v488 = vpow.pop %v487
    %v489 = vmul.f32 %v476, 1.442695
    %v490 = vpow.pop %v489
    %v491 = vmul.f32 %v477, 1.442695
    %v492 = vpow.pop %v491
    %v493 = vmul.f32 %v478, 1.442695
    %v494 = vpow.pop %v493
    %v495 = vsel %vm446, %v480, 0.0
    %496 = vadd.xlane.f32.xlu0 %v495
    %v497 = vpop.xlane.xlu0 %496
    %v498 = vsel %vm446, %v482, 0.0
    %499 = vadd.xlane.f32.xlu0 %v498
    %v500 = vpop.xlane.xlu0 %499
    %v501 = vsel %vm446, %v484, 0.0
    %502 = vadd.xlane.f32.xlu0 %v501
    %v503 = vpop.xlane.xlu0 %502
    %v504 = vsel %vm446, %v486, 0.0
    %505 = vadd.xlane.f32.xlu0 %v504
    %v506 = vpop.xlane.xlu0 %505
    %v507 = vsel %vm446, %v488, 0.0
    %508 = vadd.xlane.f32.xlu0 %v507
    %v509 = vpop.xlane.xlu0 %508
    %v510 = vsel %vm446, %v490, 0.0
    %511 = vadd.xlane.f32.xlu0 %v510
    %v512 = vpop.xlane.xlu0 %511
    %v513 = vsel %vm446, %v492, 0.0
    %514 = vadd.xlane.f32.xlu0 %v513
    %v515 = vpop.xlane.xlu0 %514
    %v516 = vsel %vm446, %v494, 0.0
    %517 = vadd.xlane.f32.xlu0 %v516
    %v518 = vpop.xlane.xlu0 %517
    %v519 = vrcp.pop %v497
    %v520 = vrcp.pop %v500
    %v521 = vrcp.pop %v503
    %v522 = vrcp.pop %v506
    %v523 = vrcp.pop %v509
    %v524 = vrcp.pop %v512
    %v525 = vrcp.pop %v515
    %v526 = vrcp.pop %v518
    %v527 = vmul.f32 %v480, %v519
    %v528 = vmul.f32 %v482, %v520
    %v529 = vmul.f32 %v484, %v521
    %v530 = vmul.f32 %v486, %v522
    %v531 = vmul.f32 %v488, %v523
    %v532 = vmul.f32 %v490, %v524
    %v533 = vmul.f32 %v492, %v525
    %v534 = vmul.f32 %v494, %v526
    %v535 = vpack.c.bf16 %v528, %v527
    %v536 = vpack.c.bf16 %v530, %v529
    %v537 = vpack.c.bf16 %v532, %v531
    %v538 = vpack.c.bf16 %v534, %v533
    %v540 = vsel %vm446, %v535, 0
    %v543 = vsel %vm446, %v214, 0
    %545 = vmatprep.subr.bf16.mxu0 0
    %546 = vmatpush1.bf16.xpose.msra.mxu0 %v543
    %547 = vmatprep.subr.bf16.mxu0 0
    %548 = vmatpush1.bf16.xpose.msra.mxu0 0
    %549 = vmatprep.subr.bf16.mxu0 0
    %550 = vmatpush1.bf16.xpose.msra.mxu0 0
    %551 = vmatprep.subr.bf16.mxu0 0
    %552 = vmatpush1.bf16.xpose.msra.mxu0 0
    %553 = vmatprep.subr.bf16.mxu0 0
    %554 = vmatpush1.bf16.xpose.msra.mxu0 0
    %555 = vmatprep.subr.bf16.mxu0 0
    %556 = vmatpush1.bf16.xpose.msra.mxu0 0
    %557 = vmatprep.subr.bf16.mxu0 0
    %558 = vmatpush1.bf16.xpose.msra.mxu0 0
    %559 = vmatprep.subr.bf16.mxu0 0
    %560 = vmatpush1.bf16.xpose.msra.mxu0 0
    %561 = vmatprep.subr.bf16.mxu0 0
    %562 = vmatpush1.bf16.xpose.msra.mxu0 0
    %563 = vmatprep.subr.bf16.mxu0 0
    %564 = vmatpush1.bf16.xpose.msra.mxu0 0
    %565 = vmatprep.subr.bf16.mxu0 0
    %566 = vmatpush1.bf16.xpose.msra.mxu0 0
    %567 = vmatprep.subr.bf16.mxu0 0
    %568 = vmatpush1.bf16.xpose.msra.mxu0 0
    %569 = vmatprep.subr.bf16.mxu0 0
    %570 = vmatpush1.bf16.xpose.msra.mxu0 0
    %571 = vmatprep.subr.bf16.mxu0 0
    %572 = vmatpush1.bf16.xpose.msra.mxu0 0
    %573 = vmatprep.subr.bf16.mxu0 0
    %574 = vmatpush1.bf16.xpose.msra.mxu0 0
    %575 = vmatprep.subr.bf16.mxu0 0
    %576 = vmatpush1.bf16.xpose.msra.mxu0 0
    %577 = vmatprep.mubr.bf16.mxu0 0
    %578 = vmatmul.mubr.bf16.gmra.mrb[0].mxu0 %v540
    %v579 = vpop.f32.mrb[0].mxu0
    %v580 = vadd.f32 0.0, %v579
    %v581 = vpop.f32.mrb[0].mxu0
    %v582 = vpop.f32.mrb[0].mxu0
    %v583 = vadd.f32 0.0, %v582
    %v584 = vpop.f32.mrb[0].mxu0
    %585 = vdwg.mxu0
    %v587 = vsel %vm446, %v536, 0
    %v590 = vsel %vm446, %v215, 0
    %592 = vmatprep.subr.bf16.mxu0 0
    %593 = vmatpush1.bf16.xpose.msra.mxu0 %v590
    %594 = vmatprep.subr.bf16.mxu0 0
    %595 = vmatpush1.bf16.xpose.msra.mxu0 0
    %596 = vmatprep.subr.bf16.mxu0 0
    %597 = vmatpush1.bf16.xpose.msra.mxu0 0
    %598 = vmatprep.subr.bf16.mxu0 0
    %599 = vmatpush1.bf16.xpose.msra.mxu0 0
    %600 = vmatprep.subr.bf16.mxu0 0
    %601 = vmatpush1.bf16.xpose.msra.mxu0 0
    %602 = vmatprep.subr.bf16.mxu0 0
    %603 = vmatpush1.bf16.xpose.msra.mxu0 0
    %604 = vmatprep.subr.bf16.mxu0 0
    %605 = vmatpush1.bf16.xpose.msra.mxu0 0
    %606 = vmatprep.subr.bf16.mxu0 0
    %607 = vmatpush1.bf16.xpose.msra.mxu0 0
    %608 = vmatprep.subr.bf16.mxu0 0
    %609 = vmatpush1.bf16.xpose.msra.mxu0 0
    %610 = vmatprep.subr.bf16.mxu0 0
    %611 = vmatpush1.bf16.xpose.msra.mxu0 0
    %612 = vmatprep.subr.bf16.mxu0 0
    %613 = vmatpush1.bf16.xpose.msra.mxu0 0
    %614 = vmatprep.subr.bf16.mxu0 0
    %615 = vmatpush1.bf16.xpose.msra.mxu0 0
    %616 = vmatprep.subr.bf16.mxu0 0
    %617 = vmatpush1.bf16.xpose.msra.mxu0 0
    %618 = vmatprep.subr.bf16.mxu0 0
    %619 = vmatpush1.bf16.xpose.msra.mxu0 0
    %620 = vmatprep.subr.bf16.mxu0 0
    %621 = vmatpush1.bf16.xpose.msra.mxu0 0
    %622 = vmatprep.subr.bf16.mxu0 0
    %623 = vmatpush1.bf16.xpose.msra.mxu0 0
    %624 = vmatprep.mubr.bf16.mxu0 0
    %625 = vmatmul.mubr.bf16.gmra.mrb[0].mxu0 %v587
    %v626 = vpop.f32.mrb[0].mxu0
    %v627 = vadd.f32 0.0, %v626
    %v628 = vpop.f32.mrb[0].mxu0
    %v629 = vpop.f32.mrb[0].mxu0
    %v630 = vadd.f32 0.0, %v629
    %v631 = vpop.f32.mrb[0].mxu0
    %632 = vdwg.mxu0
    %v634 = vsel %vm446, %v537, 0
    %v637 = vsel %vm446, %v216, 0
    %639 = vmatprep.subr.bf16.mxu0 0
    %640 = vmatpush1.bf16.xpose.msra.mxu0 %v637
    %641 = vmatprep.subr.bf16.mxu0 0
    %642 = vmatpush1.bf16.xpose.msra.mxu0 0
    %643 = vmatprep.subr.bf16.mxu0 0
    %644 = vmatpush1.bf16.xpose.msra.mxu0 0
    %645 = vmatprep.subr.bf16.mxu0 0
    %646 = vmatpush1.bf16.xpose.msra.mxu0 0
    %647 = vmatprep.subr.bf16.mxu0 0
    %648 = vmatpush1.bf16.xpose.msra.mxu0 0
    %649 = vmatprep.subr.bf16.mxu0 0
    %650 = vmatpush1.bf16.xpose.msra.mxu0 0
    %651 = vmatprep.subr.bf16.mxu0 0
    %652 = vmatpush1.bf16.xpose.msra.mxu0 0
    %653 = vmatprep.subr.bf16.mxu0 0
    %654 = vmatpush1.bf16.xpose.msra.mxu0 0
    %655 = vmatprep.subr.bf16.mxu0 0
    %656 = vmatpush1.bf16.xpose.msra.mxu0 0
    %657 = vmatprep.subr.bf16.mxu0 0
    %658 = vmatpush1.bf16.xpose.msra.mxu0 0
    %659 = vmatprep.subr.bf16.mxu0 0
    %660 = vmatpush1.bf16.xpose.msra.mxu0 0
    %661 = vmatprep.subr.bf16.mxu0 0
    %662 = vmatpush1.bf16.xpose.msra.mxu0 0
    %663 = vmatprep.subr.bf16.mxu0 0
    %664 = vmatpush1.bf16.xpose.msra.mxu0 0
    %665 = vmatprep.subr.bf16.mxu0 0
    %666 = vmatpush1.bf16.xpose.msra.mxu0 0
    %667 = vmatprep.subr.bf16.mxu0 0
    %668 = vmatpush1.bf16.xpose.msra.mxu0 0
    %669 = vmatprep.subr.bf16.mxu0 0
    %670 = vmatpush1.bf16.xpose.msra.mxu0 0
    %671 = vmatprep.mubr.bf16.mxu0 0
    %672 = vmatmul.mubr.bf16.gmra.mrb[0].mxu0 %v634
    %v673 = vpop.f32.mrb[0].mxu0
    %v674 = vadd.f32 0.0, %v673
    %v675 = vpop.f32.mrb[0].mxu0
    %v676 = vpop.f32.mrb[0].mxu0
    %v677 = vadd.f32 0.0, %v676
    %v678 = vpop.f32.mrb[0].mxu0
    %679 = vdwg.mxu0
    %v681 = vsel %vm446, %v538, 0
    %v684 = vsel %vm446, %v217, 0
    %686 = vmatprep.subr.bf16.mxu0 0
    %687 = vmatpush1.bf16.xpose.msra.mxu0 %v684
    %688 = vmatprep.subr.bf16.mxu0 0
    %689 = vmatpush1.bf16.xpose.msra.mxu0 0
    %690 = vmatprep.subr.bf16.mxu0 0
    %691 = vmatpush1.bf16.xpose.msra.mxu0 0
    %692 = vmatprep.subr.bf16.mxu0 0
    %693 = vmatpush1.bf16.xpose.msra.mxu0 0
    %694 = vmatprep.subr.bf16.mxu0 0
    %695 = vmatpush1.bf16.xpose.msra.mxu0 0
    %696 = vmatprep.subr.bf16.mxu0 0
    %697 = vmatpush1.bf16.xpose.msra.mxu0 0
    %698 = vmatprep.subr.bf16.mxu0 0
    %699 = vmatpush1.bf16.xpose.msra.mxu0 0
    %700 = vmatprep.subr.bf16.mxu0 0
    %701 = vmatpush1.bf16.xpose.msra.mxu0 0
    %702 = vmatprep.subr.bf16.mxu0 0
    %703 = vmatpush1.bf16.xpose.msra.mxu0 0
    %704 = vmatprep.subr.bf16.mxu0 0
    %705 = vmatpush1.bf16.xpose.msra.mxu0 0
    %706 = vmatprep.subr.bf16.mxu0 0
    %707 = vmatpush1.bf16.xpose.msra.mxu0 0
    %708 = vmatprep.subr.bf16.mxu0 0
    %709 = vmatpush1.bf16.xpose.msra.mxu0 0
    %710 = vmatprep.subr.bf16.mxu0 0
    %711 = vmatpush1.bf16.xpose.msra.mxu0 0
    %712 = vmatprep.subr.bf16.mxu0 0
    %713 = vmatpush1.bf16.xpose.msra.mxu0 0
    %714 = vmatprep.subr.bf16.mxu0 0
    %715 = vmatpush1.bf16.xpose.msra.mxu0 0
    %716 = vmatprep.subr.bf16.mxu0 0
    %717 = vmatpush1.bf16.xpose.msra.mxu0 0
    %718 = vmatprep.mubr.bf16.mxu0 0
    %719 = vmatmul.mubr.bf16.gmra.mrb[0].mxu0 %v681
    %v720 = vpop.f32.mrb[0].mxu0
    %v721 = vadd.f32 0.0, %v720
    %v722 = vpop.f32.mrb[0].mxu0
    %v723 = vpop.f32.mrb[0].mxu0
    %v724 = vadd.f32 0.0, %v723
    %v725 = vpop.f32.mrb[0].mxu0
    %726 = vdwg.mxu0
    %v727 = vpack.c.bf16 %v583, %v580
    %v728 = vpack.c.bf16 %v630, %v627
    %v729 = vpack.c.bf16 %v677, %v674
    %v730 = vpack.c.bf16 %v724, %v721
    %v731 = vld [vmem:[%s5] sm:$0xf]
    %v732 = vld [vmem:[%s5 + $0x4] sm:$0xf]
    %v733 = vld [vmem:[%s5 + $0x8] sm:$0xf]
    %v734 = vld [vmem:[%s5 + $0xc] sm:$0xf]
    %v736 = vsel %vm233, %v727, 0
    %v739 = vsel %vm237, %v731, 0
    %741 = vmatprep.subr.bf16.mxu0 0
    %742 = vmatpush1.bf16.msra.mxu0 %v739
    %743 = vmatprep.subr.bf16.mxu0 0
    %744 = vmatpush1.bf16.msra.mxu0 0
    %745 = vmatprep.subr.bf16.mxu0 0
    %746 = vmatpush1.bf16.msra.mxu0 0
    %747 = vmatprep.subr.bf16.mxu0 0
    %748 = vmatpush1.bf16.msra.mxu0 0
    %749 = vmatprep.subr.bf16.mxu0 0
    %750 = vmatpush1.bf16.msra.mxu0 0
    %751 = vmatprep.subr.bf16.mxu0 0
    %752 = vmatpush1.bf16.msra.mxu0 0
    %753 = vmatprep.subr.bf16.mxu0 0
    %754 = vmatpush1.bf16.msra.mxu0 0
    %755 = vmatprep.subr.bf16.mxu0 0
    %756 = vmatpush1.bf16.msra.mxu0 0
    %757 = vmatprep.subr.bf16.mxu0 0
    %758 = vmatpush1.bf16.msra.mxu0 0
    %759 = vmatprep.subr.bf16.mxu0 0
    %760 = vmatpush1.bf16.msra.mxu0 0
    %761 = vmatprep.subr.bf16.mxu0 0
    %762 = vmatpush1.bf16.msra.mxu0 0
    %763 = vmatprep.subr.bf16.mxu0 0
    %764 = vmatpush1.bf16.msra.mxu0 0
    %765 = vmatprep.subr.bf16.mxu0 0
    %766 = vmatpush1.bf16.msra.mxu0 0
    %767 = vmatprep.subr.bf16.mxu0 0
    %768 = vmatpush1.bf16.msra.mxu0 0
    %769 = vmatprep.subr.bf16.mxu0 0
    %770 = vmatpush1.bf16.msra.mxu0 0
    %771 = vmatprep.subr.bf16.mxu0 0
    %772 = vmatpush1.bf16.msra.mxu0 0
    %773 = vmatprep.mubr.bf16.mxu0 0
    %774 = vmatmul.mubr.bf16.gmra.mrb[0].mxu0 %v736
    %v775 = vpop.f32.mrb[0].mxu0
    %v776 = vadd.f32 0.0, %v775
    %v777 = vpop.f32.mrb[0].mxu0
    %v778 = vpop.f32.mrb[0].mxu0
    %v779 = vadd.f32 0.0, %v778
    %v780 = vpop.f32.mrb[0].mxu0
    %781 = vdwg.mxu0
    %v783 = vsel %vm233, %v728, 0
    %v786 = vsel %vm237, %v732, 0
    %788 = vmatprep.subr.bf16.mxu0 0
    %789 = vmatpush1.bf16.msra.mxu0 %v786
    %790 = vmatprep.subr.bf16.mxu0 0
    %791 = vmatpush1.bf16.msra.mxu0 0
    %792 = vmatprep.subr.bf16.mxu0 0
    %793 = vmatpush1.bf16.msra.mxu0 0
    %794 = vmatprep.subr.bf16.mxu0 0
    %795 = vmatpush1.bf16.msra.mxu0 0
    %796 = vmatprep.subr.bf16.mxu0 0
    %797 = vmatpush1.bf16.msra.mxu0 0
    %798 = vmatprep.subr.bf16.mxu0 0
    %799 = vmatpush1.bf16.msra.mxu0 0
    %800 = vmatprep.subr.bf16.mxu0 0
    %801 = vmatpush1.bf16.msra.mxu0 0
    %802 = vmatprep.subr.bf16.mxu0 0
    %803 = vmatpush1.bf16.msra.mxu0 0
    %804 = vmatprep.subr.bf16.mxu0 0
    %805 = vmatpush1.bf16.msra.mxu0 0
    %806 = vmatprep.subr.bf16.mxu0 0
    %807 = vmatpush1.bf16.msra.mxu0 0
    %808 = vmatprep.subr.bf16.mxu0 0
    %809 = vmatpush1.bf16.msra.mxu0 0
    %810 = vmatprep.subr.bf16.mxu0 0
    %811 = vmatpush1.bf16.msra.mxu0 0
    %812 = vmatprep.subr.bf16.mxu0 0
    %813 = vmatpush1.bf16.msra.mxu0 0
    %814 = vmatprep.subr.bf16.mxu0 0
    %815 = vmatpush1.bf16.msra.mxu0 0
    %816 = vmatprep.subr.bf16.mxu0 0
    %817 = vmatpush1.bf16.msra.mxu0 0
    %818 = vmatprep.subr.bf16.mxu0 0
    %819 = vmatpush1.bf16.msra.mxu0 0
    %820 = vmatprep.mubr.bf16.mxu0 0
    %821 = vmatmul.mubr.bf16.gmra.mrb[0].mxu0 %v783
    %v822 = vpop.f32.mrb[0].mxu0
    %v823 = vadd.f32 0.0, %v822
    %v824 = vpop.f32.mrb[0].mxu0
    %v825 = vpop.f32.mrb[0].mxu0
    %v826 = vadd.f32 0.0, %v825
    %v827 = vpop.f32.mrb[0].mxu0
    %828 = vdwg.mxu0
    %v830 = vsel %vm233, %v729, 0
    %v833 = vsel %vm237, %v733, 0
    %835 = vmatprep.subr.bf16.mxu0 0
    %836 = vmatpush1.bf16.msra.mxu0 %v833
    %837 = vmatprep.subr.bf16.mxu0 0
    %838 = vmatpush1.bf16.msra.mxu0 0
    %839 = vmatprep.subr.bf16.mxu0 0
    %840 = vmatpush1.bf16.msra.mxu0 0
    %841 = vmatprep.subr.bf16.mxu0 0
    %842 = vmatpush1.bf16.msra.mxu0 0
    %843 = vmatprep.subr.bf16.mxu0 0
    %844 = vmatpush1.bf16.msra.mxu0 0
    %845 = vmatprep.subr.bf16.mxu0 0
    %846 = vmatpush1.bf16.msra.mxu0 0
    %847 = vmatprep.subr.bf16.mxu0 0
    %848 = vmatpush1.bf16.msra.mxu0 0
    %849 = vmatprep.subr.bf16.mxu0 0
    %850 = vmatpush1.bf16.msra.mxu0 0
    %851 = vmatprep.subr.bf16.mxu0 0
    %852 = vmatpush1.bf16.msra.mxu0 0
    %853 = vmatprep.subr.bf16.mxu0 0
    %854 = vmatpush1.bf16.msra.mxu0 0
    %855 = vmatprep.subr.bf16.mxu0 0
    %856 = vmatpush1.bf16.msra.mxu0 0
    %857 = vmatprep.subr.bf16.mxu0 0
    %858 = vmatpush1.bf16.msra.mxu0 0
    %859 = vmatprep.subr.bf16.mxu0 0
    %860 = vmatpush1.bf16.msra.mxu0 0
    %861 = vmatprep.subr.bf16.mxu0 0
    %862 = vmatpush1.bf16.msra.mxu0 0
    %863 = vmatprep.subr.bf16.mxu0 0
    %864 = vmatpush1.bf16.msra.mxu0 0
    %865 = vmatprep.subr.bf16.mxu0 0
    %866 = vmatpush1.bf16.msra.mxu0 0
    %867 = vmatprep.mubr.bf16.mxu0 0
    %868 = vmatmul.mubr.bf16.gmra.mrb[0].mxu0 %v830
    %v869 = vpop.f32.mrb[0].mxu0
    %v870 = vadd.f32 0.0, %v869
    %v871 = vpop.f32.mrb[0].mxu0
    %v872 = vpop.f32.mrb[0].mxu0
    %v873 = vadd.f32 0.0, %v872
    %v874 = vpop.f32.mrb[0].mxu0
    %875 = vdwg.mxu0
    %v877 = vsel %vm233, %v730, 0
    %v880 = vsel %vm237, %v734, 0
    %882 = vmatprep.subr.bf16.mxu0 0
    %883 = vmatpush1.bf16.msra.mxu0 %v880
    %884 = vmatprep.subr.bf16.mxu0 0
    %885 = vmatpush1.bf16.msra.mxu0 0
    %886 = vmatprep.subr.bf16.mxu0 0
    %887 = vmatpush1.bf16.msra.mxu0 0
    %888 = vmatprep.subr.bf16.mxu0 0
    %889 = vmatpush1.bf16.msra.mxu0 0
    %890 = vmatprep.subr.bf16.mxu0 0
    %891 = vmatpush1.bf16.msra.mxu0 0
    %892 = vmatprep.subr.bf16.mxu0 0
    %893 = vmatpush1.bf16.msra.mxu0 0
    %894 = vmatprep.subr.bf16.mxu0 0
    %895 = vmatpush1.bf16.msra.mxu0 0
    %896 = vmatprep.subr.bf16.mxu0 0
    %897 = vmatpush1.bf16.msra.mxu0 0
    %898 = vmatprep.subr.bf16.mxu0 0
    %899 = vmatpush1.bf16.msra.mxu0 0
    %900 = vmatprep.subr.bf16.mxu0 0
    %901 = vmatpush1.bf16.msra.mxu0 0
    %902 = vmatprep.subr.bf16.mxu0 0
    %903 = vmatpush1.bf16.msra.mxu0 0
    %904 = vmatprep.subr.bf16.mxu0 0
    %905 = vmatpush1.bf16.msra.mxu0 0
    %906 = vmatprep.subr.bf16.mxu0 0
    %907 = vmatpush1.bf16.msra.mxu0 0
    %908 = vmatprep.subr.bf16.mxu0 0
    %909 = vmatpush1.bf16.msra.mxu0 0
    %910 = vmatprep.subr.bf16.mxu0 0
    %911 = vmatpush1.bf16.msra.mxu0 0
    %912 = vmatprep.subr.bf16.mxu0 0
    %913 = vmatpush1.bf16.msra.mxu0 0
    %914 = vmatprep.mubr.bf16.mxu0 0
    %915 = vmatmul.mubr.bf16.gmra.mrb[0].mxu0 %v877
    %v916 = vpop.f32.mrb[0].mxu0
    %v917 = vadd.f32 0.0, %v916
    %v918 = vpop.f32.mrb[0].mxu0
    %v919 = vpop.f32.mrb[0].mxu0
    %v920 = vadd.f32 0.0, %v919
    %v921 = vpop.f32.mrb[0].mxu0
    %922 = vdwg.mxu0
    %v923 = vsel %vm67, %v776, 0.0
    %v924 = vsel %vm67, %v823, 0.0
    %v925 = vadd.f32 %v923, %v924
    %v926 = vsel %vm67, %v870, 0.0
    %v927 = vadd.f32 %v925, %v926
    %v928 = vsel %vm67, %v917, 0.0
    %v929 = vadd.f32 %v927, %v928
    %v930 = vsel %vm67, %v779, 0.0
    %v931 = vsel %vm67, %v826, 0.0
    %v932 = vadd.f32 %v930, %v931
    %v933 = vsel %vm67, %v873, 0.0
    %v934 = vadd.f32 %v932, %v933
    %v935 = vsel %vm67, %v920, 0.0
    %v936 = vadd.f32 %v934, %v935
    %v937 = vlaneseq
    %v938 = vshrl.u32 %v937, 7
    %v939 = vsub.s32 0, %v938
    %v940 = vrot.slane %v36, %v939
    %v941 = vadd.f32 %v929, %v940
    %v942 = vadd.f32 %v936, %v940
    %v943 = vadd.f32 %v941, %v34
    %v944 = vadd.f32 %v942, %v35
    %v945 = vsel %vm67, %v943, 0.0
    %946 = vadd.xlane.f32.xlu0 %v945
    %v947 = vpop.xlane.xlu0 %946
    %v948 = vsel %vm67, %v944, 0.0
    %949 = vadd.xlane.f32.xlu0 %v948
    %v950 = vpop.xlane.xlu0 %949
    %v951 = vrcp.pop 32.0
    %v952 = vmul.f32 %v947, %v951
    %v953 = vmul.f32 %v950, %v951
    %v954 = vsub.f32 %v943, %v952
    %v955 = vsub.f32 %v944, %v953
    %v956 = vmul.f32 %v954, %v954
    %v957 = vmul.f32 %v955, %v955
    %v958 = vsel %vm67, %v956, 0.0
    %959 = vadd.xlane.f32.xlu0 %v958
    %v960 = vpop.xlane.xlu0 %959
    %v961 = vsel %vm67, %v957, 0.0
    %962 = vadd.xlane.f32.xlu0 %v961
    %v963 = vpop.xlane.xlu0 %962
    %v964 = vmul.f32 %v960, %v951
    %v965 = vmul.f32 %v963, %v951
    %v966 = vadd.f32 %v964, 1e-05
    %v967 = vadd.f32 %v965, 1e-05
    %v968 = vrsqrt.pop %v966
    %v969 = vrsqrt.pop %v967
    %v970 = vmul.f32 %v954, %v968
    %v971 = vmul.f32 %v955, %v969
    %v972 = vlaneseq
    %v973 = vshrl.u32 %v972, 7
    %v974 = vsub.s32 1, %v973
    %v975 = vrot.slane %v36, %v974
    %v976 = vmul.f32 %v970, %v975
    %v977 = vmul.f32 %v971, %v975
    %v978 = vlaneseq
    %v979 = vshrl.u32 %v978, 7
    %v980 = vsub.s32 2, %v979
    %v981 = vrot.slane %v36, %v980
    %v982 = vadd.f32 %v976, %v981
    %v983 = vadd.f32 %v977, %v981
    %v984 = vpack.c.bf16 %v983, %v982
    %v985 = vld [vmem:[%s6] sm:$0xf]
    %v986 = vld [vmem:[%s6 + $0x4] sm:$0xf]
    %v987 = vld [vmem:[%s6 + $0x8] sm:$0xf]
    %v988 = vld [vmem:[%s6 + $0xc] sm:$0xf]
    %v989 = vlaneseq
    %v990 = vshrl.u32 %v989, 7
    %v991 = vsub.s32 3, %v990
    %v992 = vrot.slane %v36, %v991
    %v997 = vunpack.c.l.b16 %v985
    %v998 = vunpack.c.l.b16 %v986
    %v999 = vunpack.c.l.b16 %v987
    %v1000 = vunpack.c.l.b16 %v988
    %v1001 = vpack.c.b16 %v998, %v997
    %v1002 = vpack.c.b16 %v1000, %v999
    %v1006 = vsel %vm67, %v984, 0
    %1008 = vmatprep.subr.bf16.mxu0 0
    %1009 = vmatpush1.bf16.msra.mxu0 %v1001
    %1010 = vmatprep.subr.bf16.mxu0 0
    %1011 = vmatpush1.bf16.msra.mxu0 %v1002
    %1012 = vmatprep.subr.bf16.mxu0 0
    %1013 = vmatpush1.bf16.msra.mxu0 0
    %1014 = vmatprep.subr.bf16.mxu0 0
    %1015 = vmatpush1.bf16.msra.mxu0 0
    %1016 = vmatprep.subr.bf16.mxu0 0
    %1017 = vmatpush1.bf16.msra.mxu0 0
    %1018 = vmatprep.subr.bf16.mxu0 0
    %1019 = vmatpush1.bf16.msra.mxu0 0
    %1020 = vmatprep.subr.bf16.mxu0 0
    %1021 = vmatpush1.bf16.msra.mxu0 0
    %1022 = vmatprep.subr.bf16.mxu0 0
    %1023 = vmatpush1.bf16.msra.mxu0 0
    %1024 = vmatprep.subr.bf16.mxu0 0
    %1025 = vmatpush1.bf16.msra.mxu0 0
    %1026 = vmatprep.subr.bf16.mxu0 0
    %1027 = vmatpush1.bf16.msra.mxu0 0
    %1028 = vmatprep.subr.bf16.mxu0 0
    %1029 = vmatpush1.bf16.msra.mxu0 0
    %1030 = vmatprep.subr.bf16.mxu0 0
    %1031 = vmatpush1.bf16.msra.mxu0 0
    %1032 = vmatprep.subr.bf16.mxu0 0
    %1033 = vmatpush1.bf16.msra.mxu0 0
    %1034 = vmatprep.subr.bf16.mxu0 0
    %1035 = vmatpush1.bf16.msra.mxu0 0
    %1036 = vmatprep.subr.bf16.mxu0 0
    %1037 = vmatpush1.bf16.msra.mxu0 0
    %1038 = vmatprep.subr.bf16.mxu0 0
    %1039 = vmatpush1.bf16.msra.mxu0 0
    %1040 = vmatprep.mubr.bf16.mxu0 0
    %1041 = vmatmul.mubr.bf16.gmra.mrb[0].mxu0 %v1006
    %v1042 = vpop.f32.mrb[0].mxu0
    %v1043 = vadd.f32 %v992, %v1042
    %v1044 = vpop.f32.mrb[0].mxu0
    %v1045 = vpop.f32.mrb[0].mxu0
    %v1046 = vadd.f32 %v992, %v1045
    %v1047 = vpop.f32.mrb[0].mxu0
    %1048 = vdwg.mxu0
    %v1049 = vmax.f32 %v1043, 0.0
    %v1050 = vmax.f32 %v1046, 0.0
    %v1051 = vpack.c.bf16 %v1050, %v1049
    %v1052 = vld [vmem:[%s7] sm:$0xf]
    %v1053 = vld [vmem:[%s7 + $0x4] sm:$0xf]
    %v1054 = vld [vmem:[%s7 + $0x8] sm:$0xf]
    %v1055 = vld [vmem:[%s7 + $0xc] sm:$0xf]
    %v1056 = vld [vmem:[%s7 + $0x10] sm:$0xf]
    %v1057 = vld [vmem:[%s7 + $0x14] sm:$0xf]
    %v1058 = vld [vmem:[%s7 + $0x18] sm:$0xf]
    %v1059 = vld [vmem:[%s7 + $0x1c] sm:$0xf]
    %v1060 = vld [vmem:[%s7 + $0x20] sm:$0xf]
    %v1061 = vld [vmem:[%s7 + $0x24] sm:$0xf]
    %v1062 = vld [vmem:[%s7 + $0x28] sm:$0xf]
    %v1063 = vld [vmem:[%s7 + $0x2c] sm:$0xf]
    %v1064 = vld [vmem:[%s7 + $0x30] sm:$0xf]
    %v1065 = vld [vmem:[%s7 + $0x34] sm:$0xf]
    %v1066 = vld [vmem:[%s7 + $0x38] sm:$0xf]
    %v1067 = vld [vmem:[%s7 + $0x3c] sm:$0xf]
    %v1068 = vlaneseq
    %v1069 = vshrl.u32 %v1068, 7
    %v1070 = vsub.s32 4, %v1069
    %v1071 = vrot.slane %v36, %v1070
    %v1088 = vunpack.c.l.b16 %v1052
    %v1089 = vunpack.c.l.b16 %v1053
    %v1090 = vunpack.c.l.b16 %v1054
    %v1091 = vunpack.c.l.b16 %v1055
    %v1092 = vunpack.c.l.b16 %v1056
    %v1093 = vunpack.c.l.b16 %v1057
    %v1094 = vunpack.c.l.b16 %v1058
    %v1095 = vunpack.c.l.b16 %v1059
    %v1096 = vunpack.c.l.b16 %v1060
    %v1097 = vunpack.c.l.b16 %v1061
    %v1098 = vunpack.c.l.b16 %v1062
    %v1099 = vunpack.c.l.b16 %v1063
    %v1100 = vunpack.c.l.b16 %v1064
    %v1101 = vunpack.c.l.b16 %v1065
    %v1102 = vunpack.c.l.b16 %v1066
    %v1103 = vunpack.c.l.b16 %v1067
    %v1104 = vpack.c.b16 %v1089, %v1088
    %v1105 = vpack.c.b16 %v1091, %v1090
    %v1106 = vpack.c.b16 %v1093, %v1092
    %v1107 = vpack.c.b16 %v1095, %v1094
    %v1108 = vpack.c.b16 %v1097, %v1096
    %v1109 = vpack.c.b16 %v1099, %v1098
    %v1110 = vpack.c.b16 %v1101, %v1100
    %v1111 = vpack.c.b16 %v1103, %v1102
    %1120 = vmatprep.subr.bf16.mxu0 0
    %1121 = vmatpush1.bf16.msra.mxu0 %v1104
    %1122 = vmatprep.subr.bf16.mxu0 0
    %1123 = vmatpush1.bf16.msra.mxu0 %v1105
    %1124 = vmatprep.subr.bf16.mxu0 0
    %1125 = vmatpush1.bf16.msra.mxu0 %v1106
    %1126 = vmatprep.subr.bf16.mxu0 0
    %1127 = vmatpush1.bf16.msra.mxu0 %v1107
    %1128 = vmatprep.subr.bf16.mxu0 0
    %1129 = vmatpush1.bf16.msra.mxu0 %v1108
    %1130 = vmatprep.subr.bf16.mxu0 0
    %1131 = vmatpush1.bf16.msra.mxu0 %v1109
    %1132 = vmatprep.subr.bf16.mxu0 0
    %1133 = vmatpush1.bf16.msra.mxu0 %v1110
    %1134 = vmatprep.subr.bf16.mxu0 0
    %1135 = vmatpush1.bf16.msra.mxu0 %v1111
    %1136 = vmatprep.subr.bf16.mxu0 0
    %1137 = vmatpush1.bf16.msra.mxu0 0
    %1138 = vmatprep.subr.bf16.mxu0 0
    %1139 = vmatpush1.bf16.msra.mxu0 0
    %1140 = vmatprep.subr.bf16.mxu0 0
    %1141 = vmatpush1.bf16.msra.mxu0 0
    %1142 = vmatprep.subr.bf16.mxu0 0
    %1143 = vmatpush1.bf16.msra.mxu0 0
    %1144 = vmatprep.subr.bf16.mxu0 0
    %1145 = vmatpush1.bf16.msra.mxu0 0
    %1146 = vmatprep.subr.bf16.mxu0 0
    %1147 = vmatpush1.bf16.msra.mxu0 0
    %1148 = vmatprep.subr.bf16.mxu0 0
    %1149 = vmatpush1.bf16.msra.mxu0 0
    %1150 = vmatprep.subr.bf16.mxu0 0
    %1151 = vmatpush1.bf16.msra.mxu0 0
    %1152 = vmatprep.mubr.bf16.mxu0 0
    %1153 = vmatmul.mubr.bf16.gmra.mrb[0].mxu0 %v1051
    %v1154 = vpop.f32.mrb[0].mxu0
    %v1155 = vadd.f32 %v1071, %v1154
    %v1156 = vpop.f32.mrb[0].mxu0
    %v1157 = vpop.f32.mrb[0].mxu0
    %v1158 = vadd.f32 %v1071, %v1157
    %v1159 = vpop.f32.mrb[0].mxu0
    %1160 = vdwg.mxu0
    %v1161 = vadd.f32 %v1155, %v982
    %v1162 = vadd.f32 %v1158, %v983
    %v1163 = vsel %vm67, %v1161, 0.0
    %1164 = vadd.xlane.f32.xlu0 %v1163
    %v1165 = vpop.xlane.xlu0 %1164
    %v1166 = vsel %vm67, %v1162, 0.0
    %1167 = vadd.xlane.f32.xlu0 %v1166
    %v1168 = vpop.xlane.xlu0 %1167
    %v1169 = vmul.f32 %v1165, %v951
    %v1170 = vmul.f32 %v1168, %v951
    %v1171 = vsub.f32 %v1161, %v1169
    %v1172 = vsub.f32 %v1162, %v1170
    %v1173 = vmul.f32 %v1171, %v1171
    %v1174 = vmul.f32 %v1172, %v1172
    %v1175 = vsel %vm67, %v1173, 0.0
    %1176 = vadd.xlane.f32.xlu0 %v1175
    %v1177 = vpop.xlane.xlu0 %1176
    %v1178 = vsel %vm67, %v1174, 0.0
    %1179 = vadd.xlane.f32.xlu0 %v1178
    %v1180 = vpop.xlane.xlu0 %1179
    %v1181 = vmul.f32 %v1177, %v951
    %v1182 = vmul.f32 %v1180, %v951
    %v1183 = vadd.f32 %v1181, 1e-05
    %v1184 = vadd.f32 %v1182, 1e-05
    %v1185 = vrsqrt.pop %v1183
    %v1186 = vrsqrt.pop %v1184
    %v1187 = vmul.f32 %v1171, %v1185
    %v1188 = vmul.f32 %v1172, %v1186
    %v1189 = vlaneseq
    %v1190 = vshrl.u32 %v1189, 7
    %v1191 = vsub.s32 5, %v1190
    %v1192 = vrot.slane %v36, %v1191
    %v1193 = vmul.f32 %v1187, %v1192
    %v1194 = vmul.f32 %v1188, %v1192
    %v1195 = vlaneseq
    %v1196 = vshrl.u32 %v1195, 7
    %v1197 = vsub.s32 6, %v1196
    %v1198 = vrot.slane %v36, %v1197
    %v1199 = vadd.f32 %v1193, %v1198
    %v1200 = vadd.f32 %v1194, %v1198
    %1201 = vst.msk [vmem:[#allocation2] sm:$0xff] %vm67, %v1199
    %1202 = vst.msk [vmem:[#allocation2 + $0x8] sm:$0xff] %vm67, %v1200
    // Predicated region
    $region38: #{transformer_block.1} parent=1 // pred_check
      _
    $region39: #{transformer_block.1} parent=1 // pred_check_branch
      %1204 = sbr.rel (0) target = $region41
    $region40: #{transformer_block.1} parent=1 // pred_region
      %s1206 = ssub.s32 256, 256
      %1207 = vsyncadd [#allocation3], %s1206
      %s1208 = sshll.u32 [#allocation2], 4
      %s1209 = int_to_ptr.vmem [resolvable:$true] %s1208
      %1214 = dma.vmem_to_hbm [thread:$0]  %s1209, 256, %s9, [#allocation3], 128, 128, 8
    $region41: #{transformer_block.1} parent=1 // pred_fallthru
      _
    // Predicated region
    $region42: #{transformer_block.1} parent=1 // pred_check
      _
    $region43: #{transformer_block.1} parent=1 // pred_check_branch
      %1216 = sbr.rel (0) target = $region45
    $region44: #{transformer_block.1} parent=1 // pred_region
      %1217 = dma.done [#allocation3], 256
    $region45: #{transformer_block.1} parent=1 // pred_fallthru
      _
    %1218 = vsyncpa [#allocation3], 1

</llo_original>
